<compile_context>
chip_gen: v6e
topology: v6e:2x2x1
jax: 0.10.0
libtpu: 0.0.40
codegen_flags: <defaults>
</compile_context>

<pallas_src>
import jax
import jax.numpy as jnp
from jax.experimental import pallas as pl
from jax.experimental.pallas import tpu as pltpu


def _round_up(x: int, m: int) -> int:
    return ((x + m - 1) // m) * m


def _vmem_capacity_bytes() -> int:
    try:
        return int(pltpu.get_tpu_info().vmem_capacity_bytes)
    except Exception:
        return 64 * 1024 * 1024  # conservative (v7x-sized) fallback


def _make_kernel(margin: float, batch: int, tile_b: int, num_tiles: int,
                 inv_denom: float):
    last = num_tiles - 1
    rem = batch % tile_b  # python int; 0 => no ragged edge tile

    def kernel(s_pos_ref, s_neg_ref, out_ref, acc_ref):
        t = pl.program_id(0)

        @pl.when(t == 0)
        def _init():
            acc_ref[...] = jnp.zeros_like(acc_ref)

        # Native-dtype tiles; upcast on the VPU inside the kernel.
        s1 = s_pos_ref[...].astype(jnp.float32)           # (TILE_B, P)
        s0 = s_neg_ref[...].astype(jnp.float32)           # (TILE_B, N)

        # Per-batch-row best negative (small cross-lane reduce).
        s0_best = jnp.max(s0, axis=1, keepdims=True)      # (TILE_B, 1)
        hinge = jnp.maximum(s0_best - s1 + jnp.float32(margin), jnp.float32(0.0))

        if rem == 0:
            # Steady state: mask-free accumulation.
            acc_ref[...] += hinge
        else:
            @pl.when(t != last)
            def _steady():
                acc_ref[...] += hinge

            @pl.when(t == last)
            def _ragged():
                # Only the edge tile sees out-of-bounds (garbage) rows; mask them.
                row = jax.lax.broadcasted_iota(jnp.int32, (tile_b, 1), 0)
                acc_ref[...] += jnp.where(row < rem, hinge, jnp.float32(0.0))

        @pl.when(t == last)
        def _finalize():
            total = jnp.sum(acc_ref[...])                 # single reduce per call
            out_ref[...] = jnp.full(out_ref.shape,
                                    total * jnp.float32(inv_denom), jnp.float32)

    return kernel


def max_triplet_loss(s_pos: jax.Array, s_neg: jax.Array, margin: float,
                     *, max_tile_rows: int | None = None) -> jax.Array:
    """s_pos: [B, P, 1], s_neg: [B, N, 1] -> scalar f32 loss."""
    assert s_pos.ndim == 3 and s_pos.shape[2] == 1
    assert s_neg.ndim == 3 and s_neg.shape[2] == 1
    assert s_pos.shape[0] == s_neg.shape[0]

    b, p = s_pos.shape[0], s_pos.shape[1]
    n = s_neg.shape[1]

    # Native layout (free squeeze of the trailing 1): no transpose, no pad.
    s1 = s_pos.reshape(b, p)
    s0 = s_neg.reshape(b, n)

    isz = max(jnp.dtype(s_pos.dtype).itemsize, jnp.dtype(s_neg.dtype).itemsize)
    sub = {4: 8, 2: 16, 1: 32}.get(isz, 8)          # sublane multiple per dtype

    # VMEM bytes per resident batch row: 2 double-buffered input blocks
    # (lane-padded to 128) + the f32 accumulator row.
    lp = _round_up(p, 128)
    ln = _round_up(n, 128)
    per_row = 2 * lp * isz + 2 * ln * isz + lp * 4

    vmem_cap = _vmem_capacity_bytes()
    budget = min(vmem_cap // 3, 40 * 1024 * 1024)
    cap_rows = max(sub, (budget // per_row) // sub * sub)
    if max_tile_rows is not None:
        cap_rows = min(cap_rows, max(_round_up(max_tile_rows, sub), sub))

    if b <= cap_rows:
        tile_b = b           # block == full batch dim: always legal, never ragged
    else:
        tile_b = cap_rows    # multiple of `sub`; last tile may be ragged (masked)
    num_tiles = pl.cdiv(b, tile_b)

    kernel = _make_kernel(float(margin), b, tile_b, num_tiles, 1.0 / float(b * p))

    est_vmem = tile_b * per_row + (2 << 20)
    vmem_limit = int(min(max(est_vmem, 16 << 20), max(vmem_cap - (8 << 20), 16 << 20)))

    cost = pl.CostEstimate(
        flops=4 * b * p + b * n,
        transcendentals=0,
        bytes_accessed=b * p * jnp.dtype(s_pos.dtype).itemsize
        + b * n * jnp.dtype(s_neg.dtype).itemsize + 8 * 128 * 4,
    )

    out = pl.pallas_call(
        kernel,
        out_shape=jax.ShapeDtypeStruct((8, 128), jnp.float32),
        grid_spec=pltpu.PrefetchScalarGridSpec(
            num_scalar_prefetch=0,
            grid=(num_tiles,),
            in_specs=[
                pl.BlockSpec((tile_b, p), lambda t: (t, 0)),
                pl.BlockSpec((tile_b, n), lambda t: (t, 0)),
            ],
            out_specs=pl.BlockSpec((8, 128), lambda t: (0, 0)),
            scratch_shapes=[pltpu.VMEM((tile_b, p), jnp.float32)],
        ),
        compiler_params=pltpu.CompilerParams(
            dimension_semantics=("arbitrary",),
            vmem_limit_bytes=vmem_limit,
        ),
        cost_estimate=cost,
    )(s1, s0)

    # Every element of the output block holds the already-normalized loss.
    return out[0, 0]


def _reference(s_pos, s_neg, margin):
    s1 = s_pos[..., 0].astype(jnp.float32)
    s0 = s_neg[..., 0].astype(jnp.float32)
    return jnp.mean(jnp.maximum(jnp.max(s0, axis=1, keepdims=True) - s1 + margin, 0.0))


if __name__ == "__main__":
    key = jax.random.PRNGKey(0)
    k1, k2, k3, k4, k5, k6 = jax.random.split(key, 6)
    margin = 0.5

    # Check 1: small shapes from the module spec, f32, single tile.
    s_pos = jax.random.normal(k1, (2, 8, 1), dtype=jnp.float32)
    s_neg = jax.random.normal(k2, (2, 8, 1), dtype=jnp.float32)
    loss = max_triplet_loss(s_pos, s_neg, margin)
    jax.block_until_ready(loss)
    ref = _reference(s_pos, s_neg, margin)
    assert jnp.allclose(loss, ref, rtol=1e-5, atol=1e-6), (loss, ref)

    # Check 2: bf16 inputs (in-kernel upcast), P != N, single full-batch tile.
    s_pos2 = jax.random.normal(k3, (300, 8, 1), dtype=jnp.bfloat16)
    s_neg2 = jax.random.normal(k4, (300, 12, 1), dtype=jnp.bfloat16)
    loss2 = max_triplet_loss(s_pos2, s_neg2, margin)
    jax.block_until_ready(loss2)
    ref2 = _reference(s_pos2, s_neg2, margin)
    assert jnp.allclose(loss2, ref2, rtol=1e-5, atol=1e-6), (loss2, ref2)

    # Check 3: forced small tile -> multi-tile grid with a ragged, masked edge tile.
    s_pos3 = jax.random.normal(k5, (20, 4, 1), dtype=jnp.float32)
    s_neg3 = jax.random.normal(k6, (20, 6, 1), dtype=jnp.float32)
    loss3 = max_triplet_loss(s_pos3, s_neg3, margin, max_tile_rows=8)
    jax.block_until_ready(loss3)
    ref3 = _reference(s_pos3, s_neg3, margin)
    assert jnp.allclose(loss3, ref3, rtol=1e-5, atol=1e-6), (loss3, ref3)

    print("KERNEL_OK")
</pallas_src>

<mosaic_0001>
module attributes {stable_mosaic.version = 11 : i64} {
  func.func @kernel(%arg0: i32, %arg1: memref<2x8xf32, #tpu.memory_space<vmem>>, %arg2: memref<2x8xf32, #tpu.memory_space<vmem>>, %arg3: memref<8x128xf32, #tpu.memory_space<vmem>>, %arg4: memref<2x8xf32, #tpu.memory_space<vmem>>) attributes {dimension_semantics = [#tpu.dimension_semantics<arbitrary>], iteration_bounds = array<i64: 1>, scalar_prefetch = 0 : i64, scratch_operands = 1 : i64, tpu.core_type = #tpu.core_type<tc>, window_params = [{transform_indices = @transform_0, window_bounds = array<i64: 2, 8>}, {transform_indices = @transform_1, window_bounds = array<i64: 2, 8>}, {pipeline_mode = #tpu.pipeline_mode<synchronous>, transform_indices = @transform_2, window_bounds = array<i64: 8, 128>}]} {
    %c0_i32 = arith.constant 0 : i32
    %0 = arith.cmpi eq, %arg0, %c0_i32 : i32
    %1 = arith.extui %0 : i1 to i32
    %c0_i32_0 = arith.constant 0 : i32
    %2 = arith.cmpi ne, %1, %c0_i32_0 : i32
    scf.if %2 {
      %cst_12 = arith.constant 0.000000e+00 : f32
      %19 = vector.broadcast %cst_12 : f32 to vector<2x8xf32>
      %c0_13 = arith.constant 0 : index
      %c0_14 = arith.constant 0 : index
      %20 = vector.load %arg4[%c0_13, %c0_14] : memref<2x8xf32, #tpu.memory_space<vmem>>, vector<2x8xf32>
      tpu.vector_store %arg4[%c0_13, %c0_14], %19 {strides = array<i32>} : memref<2x8xf32, #tpu.memory_space<vmem>>, vector<2x8xf32>,
    } else {
    }
    %c0 = arith.constant 0 : index
    %c0_1 = arith.constant 0 : index
    %3 = vector.load %arg1[%c0, %c0_1] : memref<2x8xf32, #tpu.memory_space<vmem>>, vector<2x8xf32>
    %c0_2 = arith.constant 0 : index
    %c0_3 = arith.constant 0 : index
    %4 = vector.load %arg2[%c0_2, %c0_3] : memref<2x8xf32, #tpu.memory_space<vmem>>, vector<2x8xf32>
    %cst = arith.constant dense<0xFF800000> : vector<2xf32>
    %5 = vector.multi_reduction <maximumf>, %4, %cst [1] : vector<2x8xf32> to vector<2xf32>
    %6 = vector.shape_cast %5 : vector<2xf32> to vector<2x1xf32>
    %7 = vector.broadcast %6 : vector<2x1xf32> to vector<2x8xf32>
    %8 = arith.subf %7, %3 : vector<2x8xf32>
    %cst_4 = arith.constant 5.000000e-01 : f32
    %9 = vector.broadcast %cst_4 : f32 to vector<2x8xf32>
    %10 = arith.addf %8, %9 : vector<2x8xf32>
    %cst_5 = arith.constant 0.000000e+00 : f32
    %11 = vector.broadcast %cst_5 : f32 to vector<2x8xf32>
    %12 = arith.maximumf %10, %11 : vector<2x8xf32>
    %c0_6 = arith.constant 0 : index
    %c0_7 = arith.constant 0 : index
    %13 = vector.load %arg4[%c0_6, %c0_7] : memref<2x8xf32, #tpu.memory_space<vmem>>, vector<2x8xf32>
    %14 = arith.addf %13, %12 : vector<2x8xf32>
    %c0_8 = arith.constant 0 : index
    %c0_9 = arith.constant 0 : index
    %15 = vector.load %arg4[%c0_8, %c0_9] : memref<2x8xf32, #tpu.memory_space<vmem>>, vector<2x8xf32>
    tpu.vector_store %arg4[%c0_8, %c0_9], %14 {strides = array<i32>} : memref<2x8xf32, #tpu.memory_space<vmem>>, vector<2x8xf32>,
    %c0_i32_10 = arith.constant 0 : i32
    %16 = arith.cmpi eq, %arg0, %c0_i32_10 : i32
    %17 = arith.extui %16 : i1 to i32
    %c0_i32_11 = arith.constant 0 : i32
    %18 = arith.cmpi ne, %17, %c0_i32_11 : i32
    scf.if %18 {
      %c0_12 = arith.constant 0 : index
      %c0_13 = arith.constant 0 : index
      %19 = vector.load %arg4[%c0_12, %c0_13] : memref<2x8xf32, #tpu.memory_space<vmem>>, vector<2x8xf32>
      %20 = vector.shape_cast %19 : vector<2x8xf32> to vector<1x2x8xf32>
      %cst_14 = arith.constant dense<0.000000e+00> : vector<1xf32>
      %21 = vector.multi_reduction <add>, %20, %cst_14 [1, 2] : vector<1x2x8xf32> to vector<1xf32>
      %22 = vector.shape_cast %21 : vector<1xf32> to vector<1x1x1xf32>
      %23 = vector.extract %22[0, 0, 0] : f32 from vector<1x1x1xf32>
      %cst_15 = arith.constant 6.250000e-02 : f32
      %24 = arith.mulf %23, %cst_15 : f32
      %25 = vector.broadcast %24 : f32 to vector<8x128xf32>
      %c0_16 = arith.constant 0 : index
      %c0_17 = arith.constant 0 : index
      %26 = vector.load %arg3[%c0_16, %c0_17] : memref<8x128xf32, #tpu.memory_space<vmem>>, vector<8x128xf32>
      tpu.vector_store %arg3[%c0_16, %c0_17], %25 {strides = array<i32>} : memref<8x128xf32, #tpu.memory_space<vmem>>, vector<8x128xf32>,
    } else {
    }
    return
  }
  func.func @transform_0(%arg0: i32) -> (i32, i32) {
    %c0_i32 = arith.constant 0 : i32
    %c0_i32_0 = arith.constant 0 : i32
    return %arg0, %c0_i32 : i32, i32
  }
  func.func @transform_1(%arg0: i32) -> (i32, i32) {
    %c0_i32 = arith.constant 0 : i32
    %c0_i32_0 = arith.constant 0 : i32
    return %arg0, %c0_i32 : i32, i32
  }
  func.func @transform_2(%arg0: i32) -> (i32, i32) {
    %c0_i32 = arith.constant 0 : i32
    %c0_i32_0 = arith.constant 0 : i32
    %c0_i32_1 = arith.constant 0 : i32
    return %c0_i32, %c0_i32_0 : i32, i32
  }
}

</mosaic_0001>

<llo_original>
// kernel: tpu_custom_call.1
$region0: #{tpu_custom_call.1}
  #allocation0 [shape = 'u32[]', space=smem, size = 0x4, offset = 0x4, fixed_abs, tag = 'smem constant byte address 0x4 - core index']
  #allocation1 [shape = 'u32[144,128]{1,0:T(1,128)}', space=vmem, size = 0x12000, scoped, tag = 'internal scratch']
  #allocation2 [shape = 'f32[2,8]{1,0:T(2,128)}', space=vmem, size = 0x400, scoped, tag = 'scratch operand']
  %s0 = inlined_call_operand.hbm [shape: f32[2,8], index: 0, kind: input, shape index: {}]
  %s1 = inlined_call_operand.hbm [shape: f32[2,8], index: 1, kind: input, shape index: {}]
  %s2 = inlined_call_operand.hbm [shape: f32[8,128], index: 2, kind: output, shape index: {}]
  %s3 = sld [smem:[#allocation0]]
  $region34: #{tpu_custom_call.1} parent=0
    _
  %s5 = ssub.s32 1, %s3
  %s6 = scalar_select 0, %s5, %s3
  $region1: #{tpu_custom_call.1} parent=0
    #allocation3 [shape = 'u8[1024]{0}', space=vmem, size = 0x400, scoped, tag = 'input window, operand 0, single buffered']
    #allocation4 [shape = 's32[1]{0}', space=sflag, size = 0x4, scoped, tag = 'scoped memory for tpu_custom_call.1']
    #allocation5 [shape = 's32[1]{0}', space=sflag, size = 0x4, scoped, tag = 'scoped memory for tpu_custom_call.1']
    #allocation6 [shape = 'u8[1024]{0}', space=vmem, size = 0x400, scoped, tag = 'input window, operand 1, single buffered']
    #allocation7 [shape = 's32[1]{0}', space=sflag, size = 0x4, scoped, tag = 'scoped memory for tpu_custom_call.1']
    #allocation8 [shape = 'u8[4096]{0}', space=vmem, size = 0x1000, scoped, tag = 'output window, operand 0, single buffered']
    %7 = vsyncpa [#allocation4], 0
    %8 = vsyncpa [#allocation7], 0
    %9 = vsyncpa [#allocation5], 0
    // Predicated region
    $region2: #{tpu_custom_call.1} parent=1 // pred_check
      _
    $region3: #{tpu_custom_call.1} parent=1 // pred_check_branch
      %11 = sbr.rel (0) target = $region5
    $region4: #{tpu_custom_call.1} parent=1 // pred_region
      %s13 = ssub.s32 32, 32
      %14 = vsyncadd [#allocation4], %s13
      %s16 = sshll.u32 [#allocation3], 4
      %s17 = int_to_ptr.vmem [resolvable:$true] %s16
      %19 = dma.hbm_to_vmem [thread:$0]  %s0, 32, %s17, [#allocation4]
    $region5: #{tpu_custom_call.1} parent=1 // pred_fallthru
      _
    // Predicated region
    $region6: #{tpu_custom_call.1} parent=1 // pred_check
      _
    $region7: #{tpu_custom_call.1} parent=1 // pred_check_branch
      %21 = sbr.rel (0) target = $region9
    $region8: #{tpu_custom_call.1} parent=1 // pred_region
      %s23 = ssub.s32 32, 32
      %24 = vsyncadd [#allocation7], %s23
      %s26 = sshll.u32 [#allocation6], 4
      %s27 = int_to_ptr.vmem [resolvable:$true] %s26
      %29 = dma.hbm_to_vmem [thread:$0]  %s1, 32, %s27, [#allocation7]
    $region9: #{tpu_custom_call.1} parent=1 // pred_fallthru
      _
    // Predicated region
    $region10: #{tpu_custom_call.1} parent=1 // pred_check
      _
    $region11: #{tpu_custom_call.1} parent=1 // pred_check_branch
      %31 = sbr.rel (0) target = $region13
    $region12: #{tpu_custom_call.1} parent=1 // pred_region
      %32 = dma.done [#allocation4], 32
    $region13: #{tpu_custom_call.1} parent=1 // pred_fallthru
      _
    // Predicated region
    $region14: #{tpu_custom_call.1} parent=1 // pred_check
      _
    $region15: #{tpu_custom_call.1} parent=1 // pred_check_branch
      %34 = sbr.rel (0) target = $region17
    $region16: #{tpu_custom_call.1} parent=1 // pred_region
      %35 = dma.done [#allocation7], 32
    $region17: #{tpu_custom_call.1} parent=1 // pred_fallthru
      _
    %p36 = scmp.eq.s32.totalorder 0, 0
    // Predicated region
    $region18: #{tpu_custom_call.1} parent=1 // pred_check
      %p37 = pneg %p36
    $region19: #{tpu_custom_call.1} parent=1 // pred_check_branch
      %39 = sbr.rel (%p37) target = $region21
    $region20: #{tpu_custom_call.1} parent=1 // pred_region
      %vm40 = vcmask 58368
      %41 = vst.msk [vmem:[#allocation2] sm:$0x3] %vm40, 0.0
    $region21: #{tpu_custom_call.1} parent=1 // pred_fallthru
      _
    %v42 = vld [vmem:[#allocation3] sm:$0x3]
    %v43 = vld [vmem:[#allocation6] sm:$0x3]
    %vm44 = vcmask 58368
    %v45 = vsel %vm44, %v43, -inf
    %46 = vmax.xlane.f32.xlu0 %v45
    %v47 = vpop.xlane.xlu0 %46
    %v48 = vsub.f32 %v47, %v42
    %v49 = vadd.f32 %v48, 0.5
    %v50 = vmax.f32 %v49, 0.0
    %v51 = vld [vmem:[#allocation2] sm:$0x3]
    %v52 = vadd.f32 %v51, %v50
    %53 = vst.msk [vmem:[#allocation2] sm:$0x3] %vm44, %v52
    // Predicated region
    $region22: #{tpu_custom_call.1} parent=1 // pred_check
      %p54 = pneg %p36
    $region23: #{tpu_custom_call.1} parent=1 // pred_check_branch
      %56 = sbr.rel (%p54) target = $region25
    $region24: #{tpu_custom_call.1} parent=1 // pred_region
      %v57 = vld [vmem:[#allocation2] sm:$0x3]
      %v58 = vsel %vm44, %v57, 0.0
      %59 = vadd.xlane.f32.xlu0 %v58
      %v60 = vpop.xlane.xlu0 %59
      %v61 = vrot.slane %v60, 4
      %v62 = vadd.f32 %v60, %v61
      %v63 = vrot.slane %v62, 2
      %v64 = vadd.f32 %v62, %v63
      %v65 = vrot.slane %v64, 1
      %v66 = vadd.f32 %v64, %v65
      %s67 = vtos %v66
      %s68 = smul.f32 %s67, 0.0625
      %v69 = vstv %s68
      %70 = vst [vmem:[#allocation8] sm:$0xff] %v69
    $region25: #{tpu_custom_call.1} parent=1 // pred_fallthru
      _
    // Predicated region
    $region26: #{tpu_custom_call.1} parent=1 // pred_check
      _
    $region27: #{tpu_custom_call.1} parent=1 // pred_check_branch
      %72 = sbr.rel (0) target = $region29
    $region28: #{tpu_custom_call.1} parent=1 // pred_region
      %s74 = ssub.s32 128, 128
      %75 = vsyncadd [#allocation5], %s74
      %s77 = sshll.u32 [#allocation8], 4
      %s78 = int_to_ptr.vmem [resolvable:$true] %s77
      %80 = dma.vmem_to_hbm [thread:$0]  %s78, 128, %s2, [#allocation5]
    $region29: #{tpu_custom_call.1} parent=1 // pred_fallthru
      _
    // Predicated region
    $region30: #{tpu_custom_call.1} parent=1 // pred_check
      _
    $region31: #{tpu_custom_call.1} parent=1 // pred_check_branch
      %82 = sbr.rel (0) target = $region33
    $region32: #{tpu_custom_call.1} parent=1 // pred_region
      %83 = dma.done [#allocation5], 128
    $region33: #{tpu_custom_call.1} parent=1 // pred_fallthru
      _
    %84 = vsyncpa [#allocation4], 1
    %85 = vsyncpa [#allocation7], 1
    %86 = vsyncpa [#allocation5], 1

</llo_original>
